<compile_context>
chip_gen: v7x
topology: tpu7x:2x2x1
jax: 0.10.0
libtpu: 0.0.40
codegen_flags: <defaults>
</compile_context>

<pallas_src>
import math
import jax
import jax.numpy as jnp
from jax.experimental import pallas as pl
from jax.experimental.pallas import tpu as pltpu


def _film_kernel(gamma_ref, beta_ref, x_ref, o_ref):
    """gamma_ref / beta_ref : (R, 1) f32 FiLM params for this row block.
    x_ref / o_ref           : (R, T) tile of the fused (B*C, H*W) activation.
    Pure VPU FMA in f32; (R, 1) params broadcast across the lane axis."""
    x = x_ref[...].astype(jnp.float32)
    o_ref[...] = (gamma_ref[...] * x + beta_ref[...]).astype(o_ref.dtype)


def _round_up(n, m):
    return (n + m - 1) // m * m


def _choose_tiles(rows, hw, itemsize, target_bytes=4 << 20):
    """Pick (R, T) for the fused (rows, hw) view.

    T: lane-dense 128-multiple (capped at 2048); the boundary tile is masked by
       cdiv tiling, so HW need not be 128-aligned.
    R: multiple of the sublane pack size for the activation dtype, sized so an
       (R, T) block is ~target_bytes, bounded by the data extent."""
    sub = {4: 8, 2: 16, 1: 32}.get(itemsize, 8)
    T = min(_round_up(hw, 128), 2048)
    R = max(sub, (target_bytes // (T * itemsize)) // sub * sub)
    R = min(R, _round_up(rows, sub))
    return R, T


def film_forward(x_nchw, channels, gamma_w, gamma_b, beta_w, beta_b,
                 row_tile=None, hw_tile=None, donate_x=False):
    """x_nchw: (B, C, H, W); channels: (B, L).
    gamma_w/beta_w: torch-style Linear weights of shape (C, L); biases (C,)."""
    B, C, H, W = x_nchw.shape
    HW = H * W
    rows = B * C

    # Pure reshape (no HBM transpose traffic): fuse batch+channel on sublanes,
    # spatial on lanes.
    x = x_nchw.reshape(rows, HW)

    # FiLM parameters hoisted to the wrapper as tiny (B,L)@(L,C) matmuls; kept
    # in f32 so the in-kernel FMA is f32 regardless of activation dtype.
    gamma = (channels @ gamma_w.T + gamma_b).astype(jnp.float32).reshape(rows, 1)
    beta = (channels @ beta_w.T + beta_b).astype(jnp.float32).reshape(rows, 1)

    itemsize = jnp.dtype(x.dtype).itemsize
    R_def, T_def = _choose_tiles(rows, HW, itemsize)
    R = row_tile if row_tile is not None else R_def
    T = hw_tile if hw_tile is not None else T_def

    grid = (pl.cdiv(rows, R), pl.cdiv(HW, T))   # spatial axis innermost

    out = pl.pallas_call(
        _film_kernel,
        out_shape=jax.ShapeDtypeStruct((rows, HW), x.dtype),
        grid=grid,
        in_specs=[
            pl.BlockSpec((R, 1), lambda r, t: (r, 0)),   # gamma (invariant on t)
            pl.BlockSpec((R, 1), lambda r, t: (r, 0)),   # beta  (invariant on t)
            pl.BlockSpec((R, T), lambda r, t: (r, t)),   # x
        ],
        out_specs=pl.BlockSpec((R, T), lambda r, t: (r, t)),
        compiler_params=pltpu.CompilerParams(
            dimension_semantics=("parallel", "parallel"),
            vmem_limit_bytes=48 << 20),
        input_output_aliases=({2: 0} if donate_x else {}),
    )(gamma, beta, x)

    return out.reshape(B, C, H, W)


def init_film_params(key, num_channels, num_labels, dtype=jnp.float32):
    """Deterministic init matching FiLMLayer.initialize_weights():
    xavier_uniform_ on both Linear weights, gamma bias = 1, beta bias = 0."""
    k1, k2 = jax.random.split(key)
    bound = math.sqrt(6.0 / (num_labels + num_channels))
    gamma_w = jax.random.uniform(k1, (num_channels, num_labels), dtype,
                                 minval=-bound, maxval=bound)
    beta_w = jax.random.uniform(k2, (num_channels, num_labels), dtype,
                                minval=-bound, maxval=bound)
    gamma_b = jnp.ones((num_channels,), dtype)
    beta_b = jnp.zeros((num_channels,), dtype)
    return gamma_w, gamma_b, beta_w, beta_b


def _reference(x, channels, gamma_w, gamma_b, beta_w, beta_b):
    gamma = channels @ gamma_w.T + gamma_b          # (B, C)
    beta = channels @ beta_w.T + beta_b             # (B, C)
    return gamma[:, :, None, None] * x + beta[:, :, None, None]


if __name__ == "__main__":
    B, C, H, W = 2, 4, 16, 16      # x: (batch, num_channels, height, width)
    L = 8                          # num_labels

    key = jax.random.PRNGKey(0)
    kx, kc, kp, kx2 = jax.random.split(key, 4)

    x = jax.random.normal(kx, (B, C, H, W), jnp.float32)
    channels = jax.random.normal(kc, (B, L), jnp.float32)
    gamma_w, gamma_b, beta_w, beta_b = init_film_params(kp, C, L)

    # Default path: fused (B*C, HW) rows, auto tile selection.
    out = film_forward(x, channels, gamma_w, gamma_b, beta_w, beta_b)
    out = jax.block_until_ready(out)

    # Explicitly exercise the multi-tile spatial path (HW=256 -> two 128-lane tiles).
    out_tiled = film_forward(x, channels, gamma_w, gamma_b, beta_w, beta_b,
                             hw_tile=128)
    out_tiled = jax.block_until_ready(out_tiled)

    # Exercise the masked-boundary path: HW = 14*14 = 196 is not 128-aligned,
    # the lane tile rounds up to 256 and Pallas masks the boundary.
    x2 = jax.random.normal(kx2, (B, C, 14, 14), jnp.float32)
    out2 = film_forward(x2, channels, gamma_w, gamma_b, beta_w, beta_b)
    out2 = jax.block_until_ready(out2)

    ref = _reference(x, channels, gamma_w, gamma_b, beta_w, beta_b)
    ref2 = _reference(x2, channels, gamma_w, gamma_b, beta_w, beta_b)

    assert out.shape == (B, C, H, W)
    assert jnp.allclose(out, ref, atol=1e-5, rtol=1e-5)
    assert jnp.allclose(out_tiled, ref, atol=1e-5, rtol=1e-5)
    assert jnp.allclose(out2, ref2, atol=1e-5, rtol=1e-5)

    print("KERNEL_OK")
</pallas_src>

<mosaic_0001>
module attributes {stable_mosaic.version = 11 : i64} {
  func.func @_film_kernel(%arg0: i32, %arg1: i32, %arg2: memref<8x1xf32, #tpu.memory_space<vmem>>, %arg3: memref<8x1xf32, #tpu.memory_space<vmem>>, %arg4: memref<8x256xf32, #tpu.memory_space<vmem>>, %arg5: memref<8x256xf32, #tpu.memory_space<vmem>>) attributes {dimension_semantics = [#tpu.dimension_semantics<parallel>, #tpu.dimension_semantics<parallel>], iteration_bounds = array<i64: 1, 1>, scalar_prefetch = 0 : i64, scratch_operands = 0 : i64, tpu.core_type = #tpu.core_type<tc>, window_params = [{transform_indices = @transform_0, window_bounds = array<i64: 8, 1>}, {transform_indices = @transform_1, window_bounds = array<i64: 8, 1>}, {transform_indices = @transform_2, window_bounds = array<i64: 8, 256>}, {transform_indices = @transform_3, window_bounds = array<i64: 8, 256>}]} {
    %c0 = arith.constant 0 : index
    %c0_0 = arith.constant 0 : index
    %0 = vector.load %arg4[%c0, %c0_0] : memref<8x256xf32, #tpu.memory_space<vmem>>, vector<8x256xf32>
    %c0_1 = arith.constant 0 : index
    %c0_2 = arith.constant 0 : index
    %1 = vector.load %arg2[%c0_1, %c0_2] : memref<8x1xf32, #tpu.memory_space<vmem>>, vector<8x1xf32>
    %2 = vector.broadcast %1 : vector<8x1xf32> to vector<8x256xf32>
    %3 = arith.mulf %2, %0 : vector<8x256xf32>
    %c0_3 = arith.constant 0 : index
    %c0_4 = arith.constant 0 : index
    %4 = vector.load %arg3[%c0_3, %c0_4] : memref<8x1xf32, #tpu.memory_space<vmem>>, vector<8x1xf32>
    %5 = vector.broadcast %4 : vector<8x1xf32> to vector<8x256xf32>
    %6 = arith.addf %3, %5 : vector<8x256xf32>
    %c0_5 = arith.constant 0 : index
    %c0_6 = arith.constant 0 : index
    %7 = vector.load %arg5[%c0_5, %c0_6] : memref<8x256xf32, #tpu.memory_space<vmem>>, vector<8x256xf32>
    tpu.vector_store %arg5[%c0_5, %c0_6], %6 {strides = array<i32>} : memref<8x256xf32, #tpu.memory_space<vmem>>, vector<8x256xf32>,
    return
  }
  func.func @transform_0(%arg0: i32, %arg1: i32) -> (i32, i32) {
    %c0_i32 = arith.constant 0 : i32
    %c0_i32_0 = arith.constant 0 : i32
    return %arg0, %c0_i32 : i32, i32
  }
  func.func @transform_1(%arg0: i32, %arg1: i32) -> (i32, i32) {
    %c0_i32 = arith.constant 0 : i32
    %c0_i32_0 = arith.constant 0 : i32
    return %arg0, %c0_i32 : i32, i32
  }
  func.func @transform_2(%arg0: i32, %arg1: i32) -> (i32, i32) {
    %c0_i32 = arith.constant 0 : i32
    return %arg0, %arg1 : i32, i32
  }
  func.func @transform_3(%arg0: i32, %arg1: i32) -> (i32, i32) {
    %c0_i32 = arith.constant 0 : i32
    return %arg0, %arg1 : i32, i32
  }
}

</mosaic_0001>

<llo_original>
// kernel: tpu_custom_call.1
$region0: #{tpu_custom_call.1}
  #allocation0 [shape = 'u32[]', space=smem, size = 0x4, offset = 0x4, fixed_abs, tag = 'smem constant byte address 0x4 - core index']
  #allocation1 [shape = 'u32[144,128]{1,0:T(1,128)}', space=vmem, size = 0x12000, scoped, tag = 'internal scratch']
  %s0 = inlined_call_operand.vmem [shape: f32[8,1], index: 0, kind: input, shape index: {}]
  %s1 = inlined_call_operand.vmem [shape: f32[8,1], index: 1, kind: input, shape index: {}]
  %s2 = inlined_call_operand.vmem [shape: f32[8,256], index: 2, kind: input, shape index: {}]
  %s3 = inlined_call_operand.hbm [shape: f32[8,256], index: 3, kind: output, shape index: {}]
  %s4 = sld [smem:[#allocation0]]
  $region22: #{tpu_custom_call.1} parent=0
    _
  %s6 = ssub.s32 1, %s4
  %s7 = scalar_select 0, %s6, %s4
  $region1: #{tpu_custom_call.1} parent=0
    #allocation2 [shape = 'u8[8192]{0}', space=vmem, size = 0x2000, scoped, tag = 'output window, operand 0, single buffered']
    #allocation3 [shape = 's32[1]{0}', space=sflag, size = 0x4, scoped, tag = 'scoped memory for tpu_custom_call.1']
    %8 = vsyncpa [#allocation3], 0
    // Predicated region
    $region2: #{tpu_custom_call.1} parent=1 // pred_check
      _
    $region3: #{tpu_custom_call.1} parent=1 // pred_check_branch
      %10 = sbr.rel (0) target = $region5
    $region4: #{tpu_custom_call.1} parent=1 // pred_region
      _
    $region5: #{tpu_custom_call.1} parent=1 // pred_fallthru
      _
    // Predicated region
    $region6: #{tpu_custom_call.1} parent=1 // pred_check
      _
    $region7: #{tpu_custom_call.1} parent=1 // pred_check_branch
      %12 = sbr.rel (0) target = $region9
    $region8: #{tpu_custom_call.1} parent=1 // pred_region
      _
    $region9: #{tpu_custom_call.1} parent=1 // pred_fallthru
      _
    // Predicated region
    $region10: #{tpu_custom_call.1} parent=1 // pred_check
      _
    $region11: #{tpu_custom_call.1} parent=1 // pred_check_branch
      %14 = sbr.rel (0) target = $region13
    $region12: #{tpu_custom_call.1} parent=1 // pred_region
      _
    $region13: #{tpu_custom_call.1} parent=1 // pred_fallthru
      _
    %v15 = vld [vmem:[%s2] sm:$0xff]
    %v16 = vld [vmem:[%s2 + $0x8] sm:$0xff]
    %v17 = vld [vmem:[%s0] sm:$0xff]
    %19 = vset.pattern.permute.xlu0 0
    %20 = vperm.xlu0 %19, %v17
    %v21 = vpop.permute.xlu0 %20
    %v23 = vmul.f32 %v21, %v15
    %v24 = vmul.f32 %v21, %v16
    %v25 = vld [vmem:[%s1] sm:$0xff]
    %27 = vset.pattern.permute.xlu0 0
    %28 = vperm.xlu0 %27, %v25
    %v29 = vpop.permute.xlu0 %28
    %v31 = vadd.f32 %v23, %v29
    %v32 = vadd.f32 %v24, %v29
    %33 = vst [vmem:[#allocation2] sm:$0xff] %v31
    %34 = vst [vmem:[#allocation2 + $0x8] sm:$0xff] %v32
    // Predicated region
    $region14: #{tpu_custom_call.1} parent=1 // pred_check
      _
    $region15: #{tpu_custom_call.1} parent=1 // pred_check_branch
      %36 = sbr.rel (0) target = $region17
    $region16: #{tpu_custom_call.1} parent=1 // pred_region
      %s38 = ssub.s32 256, 256
      %39 = vsyncadd [#allocation3], %s38
      %s41 = sshll.u32 [#allocation2], 4
      %s42 = int_to_ptr.vmem [resolvable:$true] %s41
      %44 = dma.vmem_to_hbm [thread:$0]  %s42, 256, %s3, [#allocation3]
    $region17: #{tpu_custom_call.1} parent=1 // pred_fallthru
      _
    // Predicated region
    $region18: #{tpu_custom_call.1} parent=1 // pred_check
      _
    $region19: #{tpu_custom_call.1} parent=1 // pred_check_branch
      %46 = sbr.rel (0) target = $region21
    $region20: #{tpu_custom_call.1} parent=1 // pred_region
      %47 = dma.done [#allocation3], 256
    $region21: #{tpu_custom_call.1} parent=1 // pred_fallthru
      _
    %48 = vsyncpa [#allocation3], 1

</llo_original>
